<compile_context>
chip_gen: v7x
topology: tpu7x:2x2x1
jax: 0.10.0
libtpu: 0.0.40
codegen_flags: <defaults>
</compile_context>

<pallas_src>
import functools

import jax
import jax.numpy as jnp
from jax import lax
from jax.experimental import pallas as pl
from jax.experimental.pallas import tpu as pltpu


# ----------------------------------------------------------------------------- kernel
def _temporal_block_kernel(*refs, K, dilation, padding, L, B_blk,
                           has_downsample, is_last, compute_dtype):
    if has_downsample:
        x_ref, w1_ref, b1_ref, w2_ref, b2_ref, wd_ref, bd_ref, out_ref = refs
    else:
        x_ref, w1_ref, b1_ref, w2_ref, b2_ref, out_ref = refs
        wd_ref = bd_ref = None

    C_in = x_ref.shape[1]
    C_out = out_ref.shape[1]
    cdt = compute_dtype

    # Weights/biases are small; load once outside the per-batch loop.
    w1 = w1_ref[...]                      # (K, C_out, C_in)  bf16
    w2 = w2_ref[...]                      # (K, C_out, C_out) bf16
    b1 = b1_ref[...]                      # (C_out, 1) f32
    b2 = b2_ref[...]
    if has_downsample:
        wd = wd_ref[...]                  # (C_out, C_in) bf16
        bd = bd_ref[...]

    # Hoisted zero pads (constants) for the in-register time padding.
    if padding > 0:
        zpad_x = jnp.zeros((C_in, padding), cdt)
        zpad_h = jnp.zeros((C_out, padding), cdt)

    def per_batch(b, carry):
        # In-kernel cast: x arrives as raw f32, untouched by the wrapper.
        xb_f32 = x_ref[b]                                  # (C_in, L) f32
        xb = xb_f32.astype(cdt)

        # ---- conv1: K accumulating MXU matmuls over tap-shifted slices ----
        if padding > 0:
            xb_pad = jnp.concatenate([zpad_x, xb, zpad_x], axis=1)
        else:
            xb_pad = xb
        acc1 = None
        for k in range(K):
            t = jnp.dot(w1[k], xb_pad[:, k * dilation:k * dilation + L],
                        preferred_element_type=jnp.float32)
            acc1 = t if acc1 is None else acc1 + t
        h1 = jnp.maximum(acc1 + b1, 0.0)                   # dropout1 = id (eval)

        # ---- conv2: same pattern on the activations (pad in registers) ----
        h1c = h1.astype(cdt)
        if padding > 0:
            h1_pad = jnp.concatenate([zpad_h, h1c, zpad_h], axis=1)
        else:
            h1_pad = h1c
        acc2 = None
        for k in range(K):
            t = jnp.dot(w2[k], h1_pad[:, k * dilation:k * dilation + L],
                        preferred_element_type=jnp.float32)
            acc2 = t if acc2 is None else acc2 + t
        h2 = jnp.maximum(acc2 + b2, 0.0)                   # dropout2 = id (eval)

        # ---- residual branch ----
        if has_downsample:
            res = jnp.dot(wd, xb, preferred_element_type=jnp.float32) + bd
        else:
            res = xb_f32                                   # exact f32 identity

        y = h2 + res
        if not is_last:
            y = jnp.maximum(y, 0.0)
        out_ref[b] = y.astype(out_ref.dtype)
        return carry

    lax.fori_loop(0, B_blk, per_batch, None, unroll=True)


# ----------------------------------------------------------------------------- wrapper
def weight_norm_effective(v, g):
    """weight_norm: w = g * v / ||v||, norm over (in_ch, k) per output channel."""
    norm = jnp.sqrt(jnp.sum(v * v, axis=(1, 2), keepdims=True))
    return (g * v) / norm


def _vmem_capacity_bytes():
    try:
        return int(pltpu.get_tpu_info().vmem_capacity_bytes)
    except Exception:
        return 128 << 20   # v5e/v6e default


def _pick_batch_block(N, per_batch_block_bytes, vmem_budget, min_grid_steps=4):
    """Largest divisor of N that (a) keeps >= min_grid_steps grid steps when N
    allows it (>= 2 per TensorCore on v7x) and (b) keeps the double-buffered
    x/out blocks inside the VMEM budget."""
    max_bb = max(1, vmem_budget // max(per_batch_block_bytes, 1))
    target_steps = min(min_grid_steps, N)
    best = 1
    for bb in range(1, N + 1):
        if N % bb == 0 and bb <= max_bb and N // bb >= target_steps:
            best = max(best, bb)
    return best


def temporal_block_forward(x, params, *, kernel_size, stride, dilation, padding,
                           is_last=False, batch_block=None,
                           compute_dtype=jnp.bfloat16, out_dtype=None):
    """x: (N, C_in, L) float32 (PyTorch NCL). Returns (N, C_out, L)."""
    assert stride == 1, "TemporalBlock uses stride=1 (residual add requires it)"
    N, C_in, L = x.shape
    K = kernel_size
    # residual add requires conv output length == input length
    assert 2 * padding == (K - 1) * dilation, \
        "2*padding must equal (kernel_size-1)*dilation for length-preserving convs"

    out_dtype = x.dtype if out_dtype is None else out_dtype  # bf16 when feeding next block

    # weight_norm resolution (parameter glue, not hot path)
    w1 = weight_norm_effective(params["v1"], params["g1"])   # (C_out, C_in, K)
    w2 = weight_norm_effective(params["v2"], params["g2"])   # (C_out, C_out, K)
    C_out = w1.shape[0]
    has_downsample = C_in != C_out

    # (K, C_out, C_in) layout: one tap slab = one static ref index in the kernel.
    w1_k = jnp.transpose(w1, (2, 0, 1)).astype(compute_dtype)
    w2_k = jnp.transpose(w2, (2, 0, 1)).astype(compute_dtype)
    b1_k = params["b1"].reshape(C_out, 1).astype(jnp.float32)
    b2_k = params["b2"].reshape(C_out, 1).astype(jnp.float32)

    itm = jnp.dtype(compute_dtype).itemsize
    out_itm = jnp.dtype(out_dtype).itemsize
    x_itm = jnp.dtype(x.dtype).itemsize
    Lp = L + 2 * padding

    # ---- generation-aware VMEM budgeting ----
    cap = _vmem_capacity_bytes()
    cap_target = (36 << 20) if cap <= (64 << 20) else (96 << 20)   # v7x vs v5e/v6e
    per_batch_bytes = 2 * (C_in * L * x_itm + C_out * L * out_itm)  # dbl-buffered x/out
    interm = (2 * C_in + 4 * C_out) * Lp * 4                        # live per-batch temps
    weights = 2 * (K * C_out * (C_in + C_out) * itm + 2 * C_out * 4
                   + (C_out * C_in * itm + C_out * 4 if has_downsample else 0))
    if batch_block is None:
        budget = max(cap_target - weights - interm, per_batch_bytes)
        batch_block = _pick_batch_block(N, per_batch_bytes, budget)
    assert N % batch_block == 0, "batch_block must divide N"
    grid = (N // batch_block,)

    est = batch_block * per_batch_bytes + weights + interm
    vmem_limit = int(min(max(2 * est, 16 << 20), cap_target))
    # TODO(synk): for very long sequences, tile L with a (K-1)*dilation halo in
    # the index_map so the per-step footprint stays bounded on v7x's 64 MiB.
    # TODO(synk): single-buffer the constant-index weight/bias operands
    # (pipeline_mode=pl.Buffered(1)) once large channel counts make their
    # double-buffer footprint matter.
    # TODO(synk): pad C_in/C_out to the bf16 sublane pack (16) for very small
    # channel counts to improve MXU row utilization.

    flops = 2 * N * L * C_out * (K * C_in + K * C_out + (C_in if has_downsample else 0))
    bytes_accessed = (N * C_in * L * x_itm + N * C_out * L * out_itm
                      + K * C_out * (C_in + C_out) * itm + 2 * C_out * 4
                      + (C_out * C_in * itm + C_out * 4 if has_downsample else 0))
    cost = pl.CostEstimate(flops=int(flops), transcendentals=0,
                           bytes_accessed=int(bytes_accessed))

    in_specs = [
        pl.BlockSpec((batch_block, C_in, L), lambda n: (n, 0, 0)),
        pl.BlockSpec((K, C_out, C_in), lambda n: (0, 0, 0)),
        pl.BlockSpec((C_out, 1), lambda n: (0, 0)),
        pl.BlockSpec((K, C_out, C_out), lambda n: (0, 0, 0)),
        pl.BlockSpec((C_out, 1), lambda n: (0, 0)),
    ]
    args = [x, w1_k, b1_k, w2_k, b2_k]
    if has_downsample:
        wd_k = params["wd"][:, :, 0].astype(compute_dtype)    # (C_out, C_in)
        bd_k = params["bd"].reshape(C_out, 1).astype(jnp.float32)
        in_specs += [pl.BlockSpec((C_out, C_in), lambda n: (0, 0)),
                     pl.BlockSpec((C_out, 1), lambda n: (0, 0))]
        args += [wd_k, bd_k]

    kernel = functools.partial(
        _temporal_block_kernel,
        K=K, dilation=dilation, padding=padding, L=L, B_blk=batch_block,
        has_downsample=has_downsample, is_last=is_last, compute_dtype=compute_dtype)

    out = pl.pallas_call(
        kernel,
        out_shape=jax.ShapeDtypeStruct((N, C_out, L), out_dtype),
        grid_spec=pltpu.PrefetchScalarGridSpec(
            num_scalar_prefetch=0,
            grid=grid,
            in_specs=in_specs,
            out_specs=pl.BlockSpec((batch_block, C_out, L), lambda n: (n, 0, 0)),
        ),
        compiler_params=pltpu.CompilerParams(
            dimension_semantics=("parallel",),
            vmem_limit_bytes=vmem_limit),
        cost_estimate=cost,
    )(*args)

    return out  # native (N, C_out, L)


# ----------------------------------------------------------------------------- pure-JAX reference
def _conv1d_ref(x, w, b, stride, padding, dilation):
    y = lax.conv_general_dilated(
        x, w, window_strides=(stride,), padding=[(padding, padding)],
        rhs_dilation=(dilation,), dimension_numbers=("NCH", "OIH", "NCH"))
    return y + b[None, :, None]


def temporal_block_ref(x, params, *, kernel_size, stride, dilation, padding, is_last):
    w1 = weight_norm_effective(params["v1"], params["g1"])
    w2 = weight_norm_effective(params["v2"], params["g2"])
    C_in = x.shape[1]
    C_out = w1.shape[0]
    h1 = jax.nn.relu(_conv1d_ref(x, w1, params["b1"], stride, padding, dilation))
    h2 = jax.nn.relu(_conv1d_ref(h1, w2, params["b2"], stride, padding, dilation))
    if C_in != C_out:
        res = _conv1d_ref(x, params["wd"], params["bd"], 1, 0, 1)
    else:
        res = x
    y = h2 + res
    return y if is_last else jax.nn.relu(y)


def _make_params(key, C_in, C_out, K, with_downsample):
    k1, k2, k3, k4, k5, k6 = jax.random.split(key, 6)
    v1 = 0.01 * jax.random.normal(k1, (C_out, C_in, K), jnp.float32)
    g1 = jnp.sqrt(jnp.sum(v1 * v1, axis=(1, 2), keepdims=True))   # weight_norm init: g=||v||
    v2 = 0.01 * jax.random.normal(k2, (C_out, C_out, K), jnp.float32)
    g2 = jnp.sqrt(jnp.sum(v2 * v2, axis=(1, 2), keepdims=True))
    params = dict(
        v1=v1, g1=g1, b1=0.1 * jax.random.normal(k3, (C_out,), jnp.float32),
        v2=v2, g2=g2, b2=0.1 * jax.random.normal(k4, (C_out,), jnp.float32),
    )
    if with_downsample:
        params["wd"] = 0.01 * jax.random.normal(k5, (C_out, C_in, 1), jnp.float32)
        params["bd"] = 0.1 * jax.random.normal(k6, (C_out,), jnp.float32)
    return params


# ----------------------------------------------------------------------------- main
if __name__ == "__main__":
    # TODO(synk): nn.Dropout in training mode (random masking) has no deterministic
    # equivalent here; the kernel implements eval-mode (identity) dropout.
    key = jax.random.PRNGKey(0)
    kp1, kp2, kp3, kx1, kx2, kx3 = jax.random.split(key, 6)

    configs = [
        # (N, C_in, C_out, L, K, dilation, padding, is_last)
        (2, 4, 8, 16, 3, 2, 2, False),      # downsample residual, final ReLU
        (4, 8, 8, 32, 3, 4, 4, True),       # identity residual, last block (no final ReLU)
        (8, 16, 16, 128, 3, 1, 1, False),   # multi-batch grid block (fori_loop), lane-dense L
    ]
    pkeys = [kp1, kp2, kp3]
    xkeys = [kx1, kx2, kx3]

    for (N, C_in, C_out, L, K, dil, pad, is_last), pk, xk in zip(configs, pkeys, xkeys):
        params = _make_params(pk, C_in, C_out, K, with_downsample=(C_in != C_out))
        x = jax.random.normal(xk, (N, C_in, L), jnp.float32)

        out = temporal_block_forward(
            x, params, kernel_size=K, stride=1, dilation=dil, padding=pad,
            is_last=is_last)
        out = jax.block_until_ready(out)

        ref = temporal_block_ref(
            x, params, kernel_size=K, stride=1, dilation=dil, padding=pad,
            is_last=is_last)
        ref = jax.block_until_ready(ref)

        assert out.shape == (N, C_out, L), out.shape
        # tolerance accounts for bf16 inputs/weights with f32 accumulation
        assert jnp.allclose(out, ref, atol=1e-2, rtol=2e-2), \
            float(jnp.max(jnp.abs(out - ref)))

    print("KERNEL_OK")
</pallas_src>

<mosaic_0001>
module attributes {stable_mosaic.version = 11 : i64} {
  func.func @_temporal_block_kernel(%arg0: i32, %arg1: memref<1x4x16xf32, #tpu.memory_space<vmem>>, %arg2: memref<3x8x4xbf16, #tpu.memory_space<vmem>>, %arg3: memref<8x1xf32, #tpu.memory_space<vmem>>, %arg4: memref<3x8x8xbf16, #tpu.memory_space<vmem>>, %arg5: memref<8x1xf32, #tpu.memory_space<vmem>>, %arg6: memref<8x4xbf16, #tpu.memory_space<vmem>>, %arg7: memref<8x1xf32, #tpu.memory_space<vmem>>, %arg8: memref<1x8x16xf32, #tpu.memory_space<vmem>>) attributes {dimension_semantics = [#tpu.dimension_semantics<parallel>], iteration_bounds = array<i64: 2>, scalar_prefetch = 0 : i64, scratch_operands = 0 : i64, tpu.core_type = #tpu.core_type<tc>, window_params = [{transform_indices = @transform_0, window_bounds = array<i64: 1, 4, 16>}, {pipeline_mode = #tpu.pipeline_mode<synchronous>, transform_indices = @transform_1, window_bounds = array<i64: 3, 8, 4>}, {pipeline_mode = #tpu.pipeline_mode<synchronous>, transform_indices = @transform_2, window_bounds = array<i64: 8, 1>}, {pipeline_mode = #tpu.pipeline_mode<synchronous>, transform_indices = @transform_3, window_bounds = array<i64: 3, 8, 8>}, {pipeline_mode = #tpu.pipeline_mode<synchronous>, transform_indices = @transform_4, window_bounds = array<i64: 8, 1>}, {pipeline_mode = #tpu.pipeline_mode<synchronous>, transform_indices = @transform_5, window_bounds = array<i64: 8, 4>}, {pipeline_mode = #tpu.pipeline_mode<synchronous>, transform_indices = @transform_6, window_bounds = array<i64: 8, 1>}, {transform_indices = @transform_7, window_bounds = array<i64: 1, 8, 16>}]} {
    %c0 = arith.constant 0 : index
    %c0_0 = arith.constant 0 : index
    %c0_1 = arith.constant 0 : index
    %0 = vector.load %arg2[%c0, %c0_0, %c0_1] : memref<3x8x4xbf16, #tpu.memory_space<vmem>>, vector<3x8x4xbf16>
    %c0_2 = arith.constant 0 : index
    %c0_3 = arith.constant 0 : index
    %c0_4 = arith.constant 0 : index
    %1 = vector.load %arg4[%c0_2, %c0_3, %c0_4] : memref<3x8x8xbf16, #tpu.memory_space<vmem>>, vector<3x8x8xbf16>
    %c0_5 = arith.constant 0 : index
    %c0_6 = arith.constant 0 : index
    %2 = vector.load %arg3[%c0_5, %c0_6] : memref<8x1xf32, #tpu.memory_space<vmem>>, vector<8x1xf32>
    %c0_7 = arith.constant 0 : index
    %c0_8 = arith.constant 0 : index
    %3 = vector.load %arg5[%c0_7, %c0_8] : memref<8x1xf32, #tpu.memory_space<vmem>>, vector<8x1xf32>
    %c0_9 = arith.constant 0 : index
    %c0_10 = arith.constant 0 : index
    %4 = vector.load %arg6[%c0_9, %c0_10] : memref<8x4xbf16, #tpu.memory_space<vmem>>, vector<8x4xbf16>
    %c0_11 = arith.constant 0 : index
    %c0_12 = arith.constant 0 : index
    %5 = vector.load %arg7[%c0_11, %c0_12] : memref<8x1xf32, #tpu.memory_space<vmem>>, vector<8x1xf32>
    %cst = arith.constant 0.000000e+00 : bf16
    %6 = vector.broadcast %cst : bf16 to vector<4x2xbf16>
    %cst_13 = arith.constant 0.000000e+00 : bf16
    %7 = vector.broadcast %cst_13 : bf16 to vector<8x2xbf16>
    %c0_i32 = arith.constant 0 : i32
    %8 = arith.index_cast %c0_i32 : i32 to index
    %c0_14 = arith.constant 0 : index
    %c0_15 = arith.constant 0 : index
    %9 = vector.load %arg1[%8, %c0_14, %c0_15] : memref<1x4x16xf32, #tpu.memory_space<vmem>>, vector<1x4x16xf32>
    %10 = vector.shape_cast %9 : vector<1x4x16xf32> to vector<4x16xf32>
    %11 = arith.truncf %10 : vector<4x16xf32> to vector<4x16xbf16>
    %12 = tpu.concatenate %6, %11, %6 in 1 : vector<4x2xbf16>, vector<4x16xbf16>, vector<4x2xbf16> -> vector<4x20xbf16>
    %13 = vector.extract_strided_slice %0 {offsets = [0, 0, 0], sizes = [1, 8, 4], strides = [1, 1, 1]} : vector<3x8x4xbf16> to vector<1x8x4xbf16>
    %14 = vector.shape_cast %13 : vector<1x8x4xbf16> to vector<8x4xbf16>
    %15 = vector.extract_strided_slice %12 {offsets = [0, 0], sizes = [4, 16], strides = [1, 1]} : vector<4x20xbf16> to vector<4x16xbf16>
    %cst_16 = arith.constant dense<0.000000e+00> : vector<8x16xf32>
    %16 = tpu.matmul %14, %15, %cst_16 {dimension_numbers = #tpu.dot_dimension_numbers<[1], [0], [0], [1], [0, 0, 1, 1], [], []>} : vector<8x4xbf16>, vector<4x16xbf16>, vector<8x16xf32> -> vector<8x16xf32>
    %17 = vector.extract_strided_slice %0 {offsets = [1, 0, 0], sizes = [1, 8, 4], strides = [1, 1, 1]} : vector<3x8x4xbf16> to vector<1x8x4xbf16>
    %18 = vector.shape_cast %17 : vector<1x8x4xbf16> to vector<8x4xbf16>
    %19 = vector.extract_strided_slice %12 {offsets = [0, 2], sizes = [4, 16], strides = [1, 1]} : vector<4x20xbf16> to vector<4x16xbf16>
    %cst_17 = arith.constant dense<0.000000e+00> : vector<8x16xf32>
    %20 = tpu.matmul %18, %19, %cst_17 {dimension_numbers = #tpu.dot_dimension_numbers<[1], [0], [0], [1], [0, 0, 1, 1], [], []>} : vector<8x4xbf16>, vector<4x16xbf16>, vector<8x16xf32> -> vector<8x16xf32>
    %21 = arith.addf %16, %20 : vector<8x16xf32>
    %22 = vector.extract_strided_slice %0 {offsets = [2, 0, 0], sizes = [1, 8, 4], strides = [1, 1, 1]} : vector<3x8x4xbf16> to vector<1x8x4xbf16>
    %23 = vector.shape_cast %22 : vector<1x8x4xbf16> to vector<8x4xbf16>
    %24 = vector.extract_strided_slice %12 {offsets = [0, 4], sizes = [4, 16], strides = [1, 1]} : vector<4x20xbf16> to vector<4x16xbf16>
    %cst_18 = arith.constant dense<0.000000e+00> : vector<8x16xf32>
    %25 = tpu.matmul %23, %24, %cst_18 {dimension_numbers = #tpu.dot_dimension_numbers<[1], [0], [0], [1], [0, 0, 1, 1], [], []>} : vector<8x4xbf16>, vector<4x16xbf16>, vector<8x16xf32> -> vector<8x16xf32>
    %26 = arith.addf %21, %25 : vector<8x16xf32>
    %27 = vector.broadcast %2 : vector<8x1xf32> to vector<8x16xf32>
    %28 = arith.addf %26, %27 : vector<8x16xf32>
    %cst_19 = arith.constant 0.000000e+00 : f32
    %29 = vector.broadcast %cst_19 : f32 to vector<8x16xf32>
    %30 = arith.maximumf %28, %29 : vector<8x16xf32>
    %31 = arith.truncf %30 : vector<8x16xf32> to vector<8x16xbf16>
    %32 = tpu.concatenate %7, %31, %7 in 1 : vector<8x2xbf16>, vector<8x16xbf16>, vector<8x2xbf16> -> vector<8x20xbf16>
    %33 = vector.extract_strided_slice %1 {offsets = [0, 0, 0], sizes = [1, 8, 8], strides = [1, 1, 1]} : vector<3x8x8xbf16> to vector<1x8x8xbf16>
    %34 = vector.shape_cast %33 : vector<1x8x8xbf16> to vector<8x8xbf16>
    %35 = vector.extract_strided_slice %32 {offsets = [0, 0], sizes = [8, 16], strides = [1, 1]} : vector<8x20xbf16> to vector<8x16xbf16>
    %cst_20 = arith.constant dense<0.000000e+00> : vector<8x16xf32>
    %36 = tpu.matmul %34, %35, %cst_20 {dimension_numbers = #tpu.dot_dimension_numbers<[1], [0], [0], [1], [0, 0, 1, 1], [], []>} : vector<8x8xbf16>, vector<8x16xbf16>, vector<8x16xf32> -> vector<8x16xf32>
    %37 = vector.extract_strided_slice %1 {offsets = [1, 0, 0], sizes = [1, 8, 8], strides = [1, 1, 1]} : vector<3x8x8xbf16> to vector<1x8x8xbf16>
    %38 = vector.shape_cast %37 : vector<1x8x8xbf16> to vector<8x8xbf16>
    %39 = vector.extract_strided_slice %32 {offsets = [0, 2], sizes = [8, 16], strides = [1, 1]} : vector<8x20xbf16> to vector<8x16xbf16>
    %cst_21 = arith.constant dense<0.000000e+00> : vector<8x16xf32>
    %40 = tpu.matmul %38, %39, %cst_21 {dimension_numbers = #tpu.dot_dimension_numbers<[1], [0], [0], [1], [0, 0, 1, 1], [], []>} : vector<8x8xbf16>, vector<8x16xbf16>, vector<8x16xf32> -> vector<8x16xf32>
    %41 = arith.addf %36, %40 : vector<8x16xf32>
    %42 = vector.extract_strided_slice %1 {offsets = [2, 0, 0], sizes = [1, 8, 8], strides = [1, 1, 1]} : vector<3x8x8xbf16> to vector<1x8x8xbf16>
    %43 = vector.shape_cast %42 : vector<1x8x8xbf16> to vector<8x8xbf16>
    %44 = vector.extract_strided_slice %32 {offsets = [0, 4], sizes = [8, 16], strides = [1, 1]} : vector<8x20xbf16> to vector<8x16xbf16>
    %cst_22 = arith.constant dense<0.000000e+00> : vector<8x16xf32>
    %45 = tpu.matmul %43, %44, %cst_22 {dimension_numbers = #tpu.dot_dimension_numbers<[1], [0], [0], [1], [0, 0, 1, 1], [], []>} : vector<8x8xbf16>, vector<8x16xbf16>, vector<8x16xf32> -> vector<8x16xf32>
    %46 = arith.addf %41, %45 : vector<8x16xf32>
    %47 = vector.broadcast %3 : vector<8x1xf32> to vector<8x16xf32>
    %48 = arith.addf %46, %47 : vector<8x16xf32>
    %cst_23 = arith.constant 0.000000e+00 : f32
    %49 = vector.broadcast %cst_23 : f32 to vector<8x16xf32>
    %50 = arith.maximumf %48, %49 : vector<8x16xf32>
    %cst_24 = arith.constant dense<0.000000e+00> : vector<8x16xf32>
    %51 = tpu.matmul %4, %11, %cst_24 {dimension_numbers = #tpu.dot_dimension_numbers<[1], [0], [0], [1], [0, 0, 1, 1], [], []>} : vector<8x4xbf16>, vector<4x16xbf16>, vector<8x16xf32> -> vector<8x16xf32>
    %52 = vector.broadcast %5 : vector<8x1xf32> to vector<8x16xf32>
    %53 = arith.addf %51, %52 : vector<8x16xf32>
    %54 = arith.addf %50, %53 : vector<8x16xf32>
    %cst_25 = arith.constant 0.000000e+00 : f32
    %55 = vector.broadcast %cst_25 : f32 to vector<8x16xf32>
    %56 = arith.maximumf %54, %55 : vector<8x16xf32>
    %57 = arith.index_cast %c0_i32 : i32 to index
    %c0_26 = arith.constant 0 : index
    %c0_27 = arith.constant 0 : index
    %58 = vector.load %arg8[%57, %c0_26, %c0_27] : memref<1x8x16xf32, #tpu.memory_space<vmem>>, vector<1x8x16xf32>
    %59 = vector.shape_cast %58 : vector<1x8x16xf32> to vector<8x16xf32>
    %60 = vector.shape_cast %56 : vector<8x16xf32> to vector<1x8x16xf32>
    tpu.vector_store %arg8[%57, %c0_26, %c0_27], %60 {strides = array<i32>} : memref<1x8x16xf32, #tpu.memory_space<vmem>>, vector<1x8x16xf32>,
    %c1_i32 = arith.constant 1 : i32
    return
  }
  func.func @transform_0(%arg0: i32) -> (i32, i32, i32) {
    %c0_i32 = arith.constant 0 : i32
    %c0_i32_0 = arith.constant 0 : i32
    %c0_i32_1 = arith.constant 0 : i32
    return %arg0, %c0_i32, %c0_i32_0 : i32, i32, i32
  }
  func.func @transform_1(%arg0: i32) -> (i32, i32, i32) {
    %c0_i32 = arith.constant 0 : i32
    %c0_i32_0 = arith.constant 0 : i32
    %c0_i32_1 = arith.constant 0 : i32
    %c0_i32_2 = arith.constant 0 : i32
    return %c0_i32, %c0_i32_0, %c0_i32_1 : i32, i32, i32
  }
  func.func @transform_2(%arg0: i32) -> (i32, i32) {
    %c0_i32 = arith.constant 0 : i32
    %c0_i32_0 = arith.constant 0 : i32
    %c0_i32_1 = arith.constant 0 : i32
    return %c0_i32, %c0_i32_0 : i32, i32
  }
  func.func @transform_3(%arg0: i32) -> (i32, i32, i32) {
    %c0_i32 = arith.constant 0 : i32
    %c0_i32_0 = arith.constant 0 : i32
    %c0_i32_1 = arith.constant 0 : i32
    %c0_i32_2 = arith.constant 0 : i32
    return %c0_i32, %c0_i32_0, %c0_i32_1 : i32, i32, i32
  }
  func.func @transform_4(%arg0: i32) -> (i32, i32) {
    %c0_i32 = arith.constant 0 : i32
    %c0_i32_0 = arith.constant 0 : i32
    %c0_i32_1 = arith.constant 0 : i32
    return %c0_i32, %c0_i32_0 : i32, i32
  }
  func.func @transform_5(%arg0: i32) -> (i32, i32) {
    %c0_i32 = arith.constant 0 : i32
    %c0_i32_0 = arith.constant 0 : i32
    %c0_i32_1 = arith.constant 0 : i32
    return %c0_i32, %c0_i32_0 : i32, i32
  }
  func.func @transform_6(%arg0: i32) -> (i32, i32) {
    %c0_i32 = arith.constant 0 : i32
    %c0_i32_0 = arith.constant 0 : i32
    %c0_i32_1 = arith.constant 0 : i32
    return %c0_i32, %c0_i32_0 : i32, i32
  }
  func.func @transform_7(%arg0: i32) -> (i32, i32, i32) {
    %c0_i32 = arith.constant 0 : i32
    %c0_i32_0 = arith.constant 0 : i32
    %c0_i32_1 = arith.constant 0 : i32
    return %arg0, %c0_i32, %c0_i32_0 : i32, i32, i32
  }
}

</mosaic_0001>

<llo_original>
// kernel: tpu_custom_call.1
$region0: #{tpu_custom_call.1}
  #allocation0 [shape = 'u32[]', space=smem, size = 0x4, offset = 0x4, fixed_abs, tag = 'smem constant byte address 0x4 - core index']
  #allocation1 [shape = 'u32[144,128]{1,0:T(1,128)}', space=vmem, size = 0x12000, scoped, tag = 'internal scratch']
  %s0 = inlined_call_operand.vmem [shape: f32[2,4,16], index: 0, kind: input, shape index: {}]
  %s1 = inlined_call_operand.vmem [shape: bf16[3,8,4], index: 1, kind: input, shape index: {}]
  %s2 = inlined_call_operand.vmem [shape: f32[8,1], index: 2, kind: input, shape index: {}]
  %s3 = inlined_call_operand.vmem [shape: bf16[3,8,8], index: 3, kind: input, shape index: {}]
  %s4 = inlined_call_operand.vmem [shape: f32[8,1], index: 4, kind: input, shape index: {}]
  %s5 = inlined_call_operand.vmem [shape: bf16[8,4], index: 5, kind: input, shape index: {}]
  %s6 = inlined_call_operand.vmem [shape: f32[8,1], index: 6, kind: input, shape index: {}]
  %s7 = inlined_call_operand.hbm [shape: f32[2,8,16], index: 7, kind: output, shape index: {}]
  %s8 = sld [smem:[#allocation0]]
  $region61: #{tpu_custom_call.1} parent=0
    _
  %s10 = ssub.s32 1, %s8
  %s11 = scalar_select 0, %s10, %s8
  $region1: #{tpu_custom_call.1} parent=0
    #allocation2 [shape = 'u8[8192]{0}', space=vmem, size = 0x2000, scoped, tag = 'output window, operand 0']
    #allocation3 [shape = 's32[2]{0}', space=sflag, size = 0x8, scoped, tag = 'scoped memory for tpu_custom_call.1']
    %12 = vsyncpa [#allocation3], 0
    %s13 = scalar_lea.sflag [#allocation3], 1
    %14 = vsyncpa %s13, 0
    loop: start=0, step=1, limit=4
    $region2: #{tpu_custom_call.1} parent=1 // loop_pre_header
      _
    $region3: #{tpu_custom_call.1} parent=1 // loop_header
      %s16 = sphi 0, %s20
      %p17 = scmp.ge.s32.totalorder %s16, 4
      %s26 = sphi 0, %s28
      %s29 = sphi 0, %s26
      %s30 = sphi 0, %s29
      %s46 = sphi 0, %s30
      %s50 = sphi 0, %s50
      %s52 = sphi 0, %s50
      %s53 = sphi 0, %s52
      %s67 = sphi 0, %s53
      %s71 = sphi 0, %s71
      %s73 = sphi 0, %s71
      %s74 = sphi 0, %s73
      %s88 = sphi 0, %s74
      %s92 = sphi 0, %s92
      %s94 = sphi 0, %s92
      %s95 = sphi 0, %s94
      %s109 = sphi 0, %s95
      %s113 = sphi 0, %s113
      %s115 = sphi 0, %s113
      %s116 = sphi 0, %s115
      %s130 = sphi 0, %s116
      %s134 = sphi 0, %s134
      %s136 = sphi 0, %s134
      %s137 = sphi 0, %s136
      %s151 = sphi 0, %s137
      %s155 = sphi 0, %s155
      %s157 = sphi 0, %s155
      %s158 = sphi 0, %s157
      %s172 = sphi 0, %s158
      %s178 = sphi 0, %s180
      %s181 = sphi 0, %s178
      %s182 = sphi 0, %s181
      %s198 = sphi 0, %s182
    $region4: #{tpu_custom_call.1} parent=1 // loop_header_branch
      %19 = sbr.rel (%p17) target = $region8
    $region5: #{tpu_custom_call.1} parent=1 // loop_body
      %s21 = ssub.s32 %s16, 1
      %s22 = ssub.s32 %s16, 2
      %s23 = sadd.s32 %s16, 1
      %s24 = ssub.s32 %s16, %s23
      %p25 = scmp.eq.s32.totalorder %s24, 0
      %s27 = sadd.s32 %s26, 1
      %s28 = scalar_select %p25, %s26, %s27
      %p31 = pneg %p25
      %p32 = scmp.eq.s32.totalorder %s16, 1
      %p33 = por %p31, %p32
      %p34 = scmp.ne.s32.totalorder %s26, %s29
      %p35 = scmp.eq.s32.totalorder %s16, 0
      %p36 = por %p34, %p35
      %p37 = scmp.ne.s32.totalorder %s26, %s29
      %p38 = scmp.eq.s32.totalorder %s21, 1
      %p39 = por %p37, %p38
      %p40 = scmp.ne.s32.totalorder %s29, %s30
      %p41 = scmp.eq.s32.totalorder %s21, 0
      %p42 = por %p40, %p41
      %p43 = scmp.ne.s32.totalorder %s29, %s30
      %p44 = scmp.eq.s32.totalorder %s22, 1
      %p45 = por %p43, %p44
      %p47 = scmp.ne.s32.totalorder %s30, %s46
      %p48 = scmp.eq.s32.totalorder %s22, 0
      %p49 = por %p47, %p48
      %s51 = sadd.s32 %s50, 1
      %p54 = scmp.eq.s32.totalorder %s16, 1
      %p55 = scmp.ne.s32.totalorder %s50, %s52
      %p56 = scmp.eq.s32.totalorder %s16, 0
      %p57 = por %p55, %p56
      %p58 = scmp.ne.s32.totalorder %s50, %s52
      %p59 = scmp.eq.s32.totalorder %s21, 1
      %p60 = por %p58, %p59
      %p61 = scmp.ne.s32.totalorder %s52, %s53
      %p62 = scmp.eq.s32.totalorder %s21, 0
      %p63 = por %p61, %p62
      %p64 = scmp.ne.s32.totalorder %s52, %s53
      %p65 = scmp.eq.s32.totalorder %s22, 1
      %p66 = por %p64, %p65
      %p68 = scmp.ne.s32.totalorder %s53, %s67
      %p69 = scmp.eq.s32.totalorder %s22, 0
      %p70 = por %p68, %p69
      %s72 = sadd.s32 %s71, 1
      %p75 = scmp.eq.s32.totalorder %s16, 1
      %p76 = scmp.ne.s32.totalorder %s71, %s73
      %p77 = scmp.eq.s32.totalorder %s16, 0
      %p78 = por %p76, %p77
      %p79 = scmp.ne.s32.totalorder %s71, %s73
      %p80 = scmp.eq.s32.totalorder %s21, 1
      %p81 = por %p79, %p80
      %p82 = scmp.ne.s32.totalorder %s73, %s74
      %p83 = scmp.eq.s32.totalorder %s21, 0
      %p84 = por %p82, %p83
      %p85 = scmp.ne.s32.totalorder %s73, %s74
      %p86 = scmp.eq.s32.totalorder %s22, 1
      %p87 = por %p85, %p86
      %p89 = scmp.ne.s32.totalorder %s74, %s88
      %p90 = scmp.eq.s32.totalorder %s22, 0
      %p91 = por %p89, %p90
      %s93 = sadd.s32 %s92, 1
      %p96 = scmp.eq.s32.totalorder %s16, 1
      %p97 = scmp.ne.s32.totalorder %s92, %s94
      %p98 = scmp.eq.s32.totalorder %s16, 0
      %p99 = por %p97, %p98
      %p100 = scmp.ne.s32.totalorder %s92, %s94
      %p101 = scmp.eq.s32.totalorder %s21, 1
      %p102 = por %p100, %p101
      %p103 = scmp.ne.s32.totalorder %s94, %s95
      %p104 = scmp.eq.s32.totalorder %s21, 0
      %p105 = por %p103, %p104
      %p106 = scmp.ne.s32.totalorder %s94, %s95
      %p107 = scmp.eq.s32.totalorder %s22, 1
      %p108 = por %p106, %p107
      %p110 = scmp.ne.s32.totalorder %s95, %s109
      %p111 = scmp.eq.s32.totalorder %s22, 0
      %p112 = por %p110, %p111
      %s114 = sadd.s32 %s113, 1
      %p117 = scmp.eq.s32.totalorder %s16, 1
      %p118 = scmp.ne.s32.totalorder %s113, %s115
      %p119 = scmp.eq.s32.totalorder %s16, 0
      %p120 = por %p118, %p119
      %p121 = scmp.ne.s32.totalorder %s113, %s115
      %p122 = scmp.eq.s32.totalorder %s21, 1
      %p123 = por %p121, %p122
      %p124 = scmp.ne.s32.totalorder %s115, %s116
      %p125 = scmp.eq.s32.totalorder %s21, 0
      %p126 = por %p124, %p125
      %p127 = scmp.ne.s32.totalorder %s115, %s116
      %p128 = scmp.eq.s32.totalorder %s22, 1
      %p129 = por %p127, %p128
      %p131 = scmp.ne.s32.totalorder %s116, %s130
      %p132 = scmp.eq.s32.totalorder %s22, 0
      %p133 = por %p131, %p132
      %s135 = sadd.s32 %s134, 1
      %p138 = scmp.eq.s32.totalorder %s16, 1
      %p139 = scmp.ne.s32.totalorder %s134, %s136
      %p140 = scmp.eq.s32.totalorder %s16, 0
      %p141 = por %p139, %p140
      %p142 = scmp.ne.s32.totalorder %s134, %s136
      %p143 = scmp.eq.s32.totalorder %s21, 1
      %p144 = por %p142, %p143
      %p145 = scmp.ne.s32.totalorder %s136, %s137
      %p146 = scmp.eq.s32.totalorder %s21, 0
      %p147 = por %p145, %p146
      %p148 = scmp.ne.s32.totalorder %s136, %s137
      %p149 = scmp.eq.s32.totalorder %s22, 1
      %p150 = por %p148, %p149
      %p152 = scmp.ne.s32.totalorder %s137, %s151
      %p153 = scmp.eq.s32.totalorder %s22, 0
      %p154 = por %p152, %p153
      %s156 = sadd.s32 %s155, 1
      %p159 = scmp.eq.s32.totalorder %s16, 1
      %p160 = scmp.ne.s32.totalorder %s155, %s157
      %p161 = scmp.eq.s32.totalorder %s16, 0
      %p162 = por %p160, %p161
      %p163 = scmp.ne.s32.totalorder %s155, %s157
      %p164 = scmp.eq.s32.totalorder %s21, 1
      %p165 = por %p163, %p164
      %p166 = scmp.ne.s32.totalorder %s157, %s158
      %p167 = scmp.eq.s32.totalorder %s21, 0
      %p168 = por %p166, %p167
      %p169 = scmp.ne.s32.totalorder %s157, %s158
      %p170 = scmp.eq.s32.totalorder %s22, 1
      %p171 = por %p169, %p170
      %p173 = scmp.ne.s32.totalorder %s158, %s172
      %p174 = scmp.eq.s32.totalorder %s22, 0
      %p175 = por %p173, %p174
      %s176 = ssub.s32 %s16, %s23
      %p177 = scmp.eq.s32.totalorder %s176, 0
      %s179 = sadd.s32 %s178, 1
      %s180 = scalar_select %p177, %s178, %s179
      %p183 = pneg %p177
      %p184 = scmp.eq.s32.totalorder %s16, 1
      %p185 = por %p183, %p184
      %p186 = scmp.ne.s32.totalorder %s178, %s181
      %p187 = scmp.eq.s32.totalorder %s16, 0
      %p188 = por %p186, %p187
      %p189 = scmp.ne.s32.totalorder %s178, %s181
      %p190 = scmp.eq.s32.totalorder %s21, 1
      %p191 = por %p189, %p190
      %p192 = scmp.ne.s32.totalorder %s181, %s182
      %p193 = scmp.eq.s32.totalorder %s21, 0
      %p194 = por %p192, %p193
      %p195 = scmp.ne.s32.totalorder %s181, %s182
      %p196 = scmp.eq.s32.totalorder %s22, 1
      %p197 = por %p195, %p196
      %p199 = scmp.ne.s32.totalorder %s182, %s198
      %p200 = scmp.eq.s32.totalorder %s22, 0
      %p201 = por %p199, %p200
      %p202 = scmp.le.s32.totalorder 1, %s16
      %p203 = scmp.lt.s32.totalorder %s16, 3
      %p204 = pnand %p202, %p203
      %p205 = pneg %p204
      // Predicated region
      $region9: #{tpu_custom_call.1} parent=5 // pred_check
        _
      $region10: #{tpu_custom_call.1} parent=5 // pred_check_branch
        %207 = sbr.rel (%p204) target = $region12
      $region11: #{tpu_custom_call.1} parent=5 // pred_region
        %s208 = ssub.s32 %s16, 1
        // Predicated region
        $region13: #{tpu_custom_call.1} parent=11 // pred_check
          %p209 = pneg %p63
        $region14: #{tpu_custom_call.1} parent=11 // pred_check_branch
          %211 = sbr.rel (%p209) target = $region16
        $region15: #{tpu_custom_call.1} parent=11 // pred_region
          _
        $region16: #{tpu_custom_call.1} parent=11 // pred_fallthru
          _
        // Predicated region
        $region17: #{tpu_custom_call.1} parent=11 // pred_check
          %p212 = pneg %p84
        $region18: #{tpu_custom_call.1} parent=11 // pred_check_branch
          %214 = sbr.rel (%p212) target = $region20
        $region19: #{tpu_custom_call.1} parent=11 // pred_region
          _
        $region20: #{tpu_custom_call.1} parent=11 // pred_fallthru
          _
        // Predicated region
        $region21: #{tpu_custom_call.1} parent=11 // pred_check
          %p215 = pneg %p105
        $region22: #{tpu_custom_call.1} parent=11 // pred_check_branch
          %217 = sbr.rel (%p215) target = $region24
        $region23: #{tpu_custom_call.1} parent=11 // pred_region
          _
        $region24: #{tpu_custom_call.1} parent=11 // pred_fallthru
          _
        // Predicated region
        $region25: #{tpu_custom_call.1} parent=11 // pred_check
          %p218 = pneg %p126
        $region26: #{tpu_custom_call.1} parent=11 // pred_check_branch
          %220 = sbr.rel (%p218) target = $region28
        $region27: #{tpu_custom_call.1} parent=11 // pred_region
          _
        $region28: #{tpu_custom_call.1} parent=11 // pred_fallthru
          _
        // Predicated region
        $region29: #{tpu_custom_call.1} parent=11 // pred_check
          %p221 = pneg %p147
        $region30: #{tpu_custom_call.1} parent=11 // pred_check_branch
          %223 = sbr.rel (%p221) target = $region32
        $region31: #{tpu_custom_call.1} parent=11 // pred_region
          _
        $region32: #{tpu_custom_call.1} parent=11 // pred_fallthru
          _
        // Predicated region
        $region33: #{tpu_custom_call.1} parent=11 // pred_check
          %p224 = pneg %p168
        $region34: #{tpu_custom_call.1} parent=11 // pred_check_branch
          %226 = sbr.rel (%p224) target = $region36
        $region35: #{tpu_custom_call.1} parent=11 // pred_region
          _
        $region36: #{tpu_custom_call.1} parent=11 // pred_fallthru
          _
      $region12: #{tpu_custom_call.1} parent=5 // pred_fallthru
        _
      %p227 = scmp.lt.s32.totalorder %s16, 2
      // Predicated region
      $region37: #{tpu_custom_call.1} parent=5 // pred_check
        %p228 = pneg %p227
      $region38: #{tpu_custom_call.1} parent=5 // pred_check_branch
        %230 = sbr.rel (%p228) target = $region40
      $region39: #{tpu_custom_call.1} parent=5 // pred_region
        // Predicated region
        $region41: #{tpu_custom_call.1} parent=39 // pred_check
          %p231 = pneg %p36
        $region42: #{tpu_custom_call.1} parent=39 // pred_check_branch
          %233 = sbr.rel (%p231) target = $region44
        $region43: #{tpu_custom_call.1} parent=39 // pred_region
          %p234 = scmp.lt.s32.totalorder %s16, 1
          %s235 = scalar_select %p234, %s16, 1
          %s236 = smul.addr %s235, 4
          %s237 = scalar_lea.vmem %s0, %s236
        $region44: #{tpu_custom_call.1} parent=39 // pred_fallthru
          _
      $region40: #{tpu_custom_call.1} parent=5 // pred_fallthru
        _
      %p238 = scmp.le.s32.totalorder 1, %s16
      %p239 = scmp.lt.s32.totalorder %s16, 3
      %p240 = pnand %p238, %p239
      %p241 = pneg %p240
      // Predicated region
      $region45: #{tpu_custom_call.1} parent=5 // pred_check
        _
      $region46: #{tpu_custom_call.1} parent=5 // pred_check_branch
        %243 = sbr.rel (%p240) target = $region48
      $region47: #{tpu_custom_call.1} parent=5 // pred_region
        %s244 = ssub.s32 %s16, 1
        %p245 = scmp.lt.s32.totalorder %s21, 1
        %s246 = scalar_select %p245, %s21, 1
        %s247 = smul.addr %s246, 4
        %s248 = scalar_lea.vmem %s0, %s247
        %p249 = pneg %p42
        %p250 = pneg %p39
        %p251 = pneg %p63
        %p252 = pneg %p60
        %p253 = pneg %p84
        %p254 = pneg %p81
        %p255 = pneg %p105
        %p256 = pneg %p102
        %p257 = pneg %p126
        %p258 = pneg %p123
        %p259 = pneg %p147
        %p260 = pneg %p144
        %p261 = pneg %p168
        %p262 = pneg %p165
        %p263 = pneg %p194
        %p264 = pneg %p191
        %s265 = sand.u32 %s181, 1
        %s266 = scalar_lea.sflag [#allocation3], %s265
        %s267 = sand.u32 %s181, 1
        %s268 = smul.addr %s267, 8
        %s269 = scalar_lea.vmem [#allocation2], %s268
        %p270 = scmp.lt.s32.totalorder %s21, 1
        %s271 = scalar_select %p270, %s21, 1
        %s272 = smul.addr %s271, 4
        %s273 = scalar_lea.vmem %s0, %s272
        %v275 = vld [vmem:[%s1] sm:$0xf]
        %v276 = vld [vmem:[%s1 + $0x4] sm:$0xf]
        %v277 = vld [vmem:[%s1 + $0x8] sm:$0xf]
        %v278 = vld [vmem:[%s3] sm:$0xf]
        %v279 = vld [vmem:[%s3 + $0x4] sm:$0xf]
        %v280 = vld [vmem:[%s3 + $0x8] sm:$0xf]
        %v281 = vld [vmem:[%s2] sm:$0xff]
        %v282 = vld [vmem:[%s4] sm:$0xff]
        %v283 = vld [vmem:[%s5] sm:$0xf]
        %v284 = vld [vmem:[%s6] sm:$0xff]
        %v285 = vld [vmem:[%s273] sm:$0xf]
        %v286 = vpack.c.bf16 %v285, %v285
        %288 = vrot.lane.b32.xlu0 %v286, 2
        %v289 = vpop.permute.xlu0 %288
        %vm290 = vcmask 15360
        %v293 = vsel %vm290, 0, %v289
        %vm294 = vcmask 146432
        %v295 = vsel %vm294, %v293, 0
        %297 = vrot.lane.b32.xlu0 %v295, 126
        %v298 = vpop.permute.xlu0 %297
        %vm299 = vcmask 31744
        %v301 = vsel %vm299, %v276, 0
        %vm303 = vcmask 1041408
        %v305 = vsel %vm303, %v298, 0
        %307 = vmatprep.subr.bf16.mxu0 0
        %308 = vmatpush1.bf16.msra.mxu0 %v305
        %309 = vmatprep.subr.bf16.mxu0 0
        %310 = vmatpush1.bf16.msra.mxu0 0
        %311 = vmatprep.subr.bf16.mxu0 0
        %312 = vmatpush1.bf16.msra.mxu0 0
        %313 = vmatprep.subr.bf16.mxu0 0
        %314 = vmatpush1.bf16.msra.mxu0 0
        %315 = vmatprep.subr.bf16.mxu0 0
        %316 = vmatpush1.bf16.msra.mxu0 0
        %317 = vmatprep.subr.bf16.mxu0 0
        %318 = vmatpush1.bf16.msra.mxu0 0
        %319 = vmatprep.subr.bf16.mxu0 0
        %320 = vmatpush1.bf16.msra.mxu0 0
        %321 = vmatprep.subr.bf16.mxu0 0
        %322 = vmatpush1.bf16.msra.mxu0 0
        %323 = vmatprep.subr.bf16.mxu0 0
        %324 = vmatpush1.bf16.msra.mxu0 0
        %325 = vmatprep.subr.bf16.mxu0 0
        %326 = vmatpush1.bf16.msra.mxu0 0
        %327 = vmatprep.subr.bf16.mxu0 0
        %328 = vmatpush1.bf16.msra.mxu0 0
        %329 = vmatprep.subr.bf16.mxu0 0
        %330 = vmatpush1.bf16.msra.mxu0 0
        %331 = vmatprep.subr.bf16.mxu0 0
        %332 = vmatpush1.bf16.msra.mxu0 0
        %333 = vmatprep.subr.bf16.mxu0 0
        %334 = vmatpush1.bf16.msra.mxu0 0
        %335 = vmatprep.subr.bf16.mxu0 0
        %336 = vmatpush1.bf16.msra.mxu0 0
        %337 = vmatprep.subr.bf16.mxu0 0
        %338 = vmatpush1.bf16.msra.mxu0 0
        %339 = vmatprep.mubr.bf16.mxu0 0
        %340 = vmatmul.mubr.bf16.gmra.mrb[0].mxu0 %v301
        %v341 = vpop.f32.mrb[0].mxu0
        %v342 = vadd.f32 0.0, %v341
        %v343 = vpop.f32.mrb[0].mxu0
        %v344 = vpop.f32.mrb[0].mxu0
        %v345 = vpop.f32.mrb[0].mxu0
        %346 = vdwg.mxu0
        %v348 = vsel %vm299, %v275, 0
        %v350 = vsel %vm303, %v295, 0
        %352 = vmatprep.subr.bf16.mxu0 0
        %353 = vmatpush1.bf16.msra.mxu0 %v350
        %354 = vmatprep.subr.bf16.mxu0 0
        %355 = vmatpush1.bf16.msra.mxu0 0
        %356 = vmatprep.subr.bf16.mxu0 0
        %357 = vmatpush1.bf16.msra.mxu0 0
        %358 = vmatprep.subr.bf16.mxu0 0
        %359 = vmatpush1.bf16.msra.mxu0 0
        %360 = vmatprep.subr.bf16.mxu0 0
        %361 = vmatpush1.bf16.msra.mxu0 0
        %362 = vmatprep.subr.bf16.mxu0 0
        %363 = vmatpush1.bf16.msra.mxu0 0
        %364 = vmatprep.subr.bf16.mxu0 0
        %365 = vmatpush1.bf16.msra.mxu0 0
        %366 = vmatprep.subr.bf16.mxu0 0
        %367 = vmatpush1.bf16.msra.mxu0 0
        %368 = vmatprep.subr.bf16.mxu0 0
        %369 = vmatpush1.bf16.msra.mxu0 0
        %370 = vmatprep.subr.bf16.mxu0 0
        %371 = vmatpush1.bf16.msra.mxu0 0
        %372 = vmatprep.subr.bf16.mxu0 0
        %373 = vmatpush1.bf16.msra.mxu0 0
        %374 = vmatprep.subr.bf16.mxu0 0
        %375 = vmatpush1.bf16.msra.mxu0 0
        %376 = vmatprep.subr.bf16.mxu0 0
        %377 = vmatpush1.bf16.msra.mxu0 0
        %378 = vmatprep.subr.bf16.mxu0 0
        %379 = vmatpush1.bf16.msra.mxu0 0
        %380 = vmatprep.subr.bf16.mxu0 0
        %381 = vmatpush1.bf16.msra.mxu0 0
        %382 = vmatprep.subr.bf16.mxu0 0
        %383 = vmatpush1.bf16.msra.mxu0 0
        %384 = vmatprep.mubr.bf16.mxu0 0
        %385 = vmatmul.mubr.bf16.gmra.mrb[0].mxu0 %v348
        %v386 = vpop.f32.mrb[0].mxu0
        %v387 = vadd.f32 %v342, %v386
        %v388 = vpop.f32.mrb[0].mxu0
        %v389 = vpop.f32.mrb[0].mxu0
        %v390 = vpop.f32.mrb[0].mxu0
        %391 = vdwg.mxu0
        %392 = vrot.lane.b32.xlu0 %v295, 124
        %v393 = vpop.permute.xlu0 %392
        %v395 = vsel %vm299, %v277, 0
        %v398 = vsel %vm303, %v393, 0
        %400 = vmatprep.subr.bf16.mxu0 0
        %401 = vmatpush1.bf16.msra.mxu0 %v398
        %402 = vmatprep.subr.bf16.mxu0 0
        %403 = vmatpush1.bf16.msra.mxu0 0
        %404 = vmatprep.subr.bf16.mxu0 0
        %405 = vmatpush1.bf16.msra.mxu0 0
        %406 = vmatprep.subr.bf16.mxu0 0
        %407 = vmatpush1.bf16.msra.mxu0 0
        %408 = vmatprep.subr.bf16.mxu0 0
        %409 = vmatpush1.bf16.msra.mxu0 0
        %410 = vmatprep.subr.bf16.mxu0 0
        %411 = vmatpush1.bf16.msra.mxu0 0
        %412 = vmatprep.subr.bf16.mxu0 0
        %413 = vmatpush1.bf16.msra.mxu0 0
        %414 = vmatprep.subr.bf16.mxu0 0
        %415 = vmatpush1.bf16.msra.mxu0 0
        %416 = vmatprep.subr.bf16.mxu0 0
        %417 = vmatpush1.bf16.msra.mxu0 0
        %418 = vmatprep.subr.bf16.mxu0 0
        %419 = vmatpush1.bf16.msra.mxu0 0
        %420 = vmatprep.subr.bf16.mxu0 0
        %421 = vmatpush1.bf16.msra.mxu0 0
        %422 = vmatprep.subr.bf16.mxu0 0
        %423 = vmatpush1.bf16.msra.mxu0 0
        %424 = vmatprep.subr.bf16.mxu0 0
        %425 = vmatpush1.bf16.msra.mxu0 0
        %426 = vmatprep.subr.bf16.mxu0 0
        %427 = vmatpush1.bf16.msra.mxu0 0
        %428 = vmatprep.subr.bf16.mxu0 0
        %429 = vmatpush1.bf16.msra.mxu0 0
        %430 = vmatprep.subr.bf16.mxu0 0
        %431 = vmatpush1.bf16.msra.mxu0 0
        %432 = vmatprep.mubr.bf16.mxu0 0
        %433 = vmatmul.mubr.bf16.gmra.mrb[0].mxu0 %v395
        %v434 = vpop.f32.mrb[0].mxu0
        %v435 = vadd.f32 0.0, %v434
        %v436 = vpop.f32.mrb[0].mxu0
        %v437 = vpop.f32.mrb[0].mxu0
        %v438 = vpop.f32.mrb[0].mxu0
        %439 = vdwg.mxu0
        %v440 = vadd.f32 %v387, %v435
        %442 = vset.pattern.permute.xlu0 0
        %443 = vperm.xlu0 %442, %v281
        %v444 = vpop.permute.xlu0 %443
        %v446 = vadd.f32 %v440, %v444
        %v447 = vmax.f32 %v446, 0.0
        %v448 = vpack.c.bf16 %v447, %v447
        %450 = vrot.lane.b32.xlu0 %v448, 2
        %v451 = vpop.permute.xlu0 %450
        %v453 = vsel %vm290, 0, %v451
        %v454 = vsel %vm294, %v453, 0
        %456 = vrot.lane.b32.xlu0 %v454, 126
        %v457 = vpop.permute.xlu0 %456
        %vm458 = vcmask 64512
        %v460 = vsel %vm458, %v279, 0
        %vm462 = vcmask 1043456
        %v464 = vsel %vm462, %v457, 0
        %466 = vmatprep.subr.bf16.mxu0 0
        %467 = vmatpush1.bf16.msra.mxu0 %v464
        %468 = vmatprep.subr.bf16.mxu0 0
        %469 = vmatpush1.bf16.msra.mxu0 0
        %470 = vmatprep.subr.bf16.mxu0 0
        %471 = vmatpush1.bf16.msra.mxu0 0
        %472 = vmatprep.subr.bf16.mxu0 0
        %473 = vmatpush1.bf16.msra.mxu0 0
        %474 = vmatprep.subr.bf16.mxu0 0
        %475 = vmatpush1.bf16.msra.mxu0 0
        %476 = vmatprep.subr.bf16.mxu0 0
        %477 = vmatpush1.bf16.msra.mxu0 0
        %478 = vmatprep.subr.bf16.mxu0 0
        %479 = vmatpush1.bf16.msra.mxu0 0
        %480 = vmatprep.subr.bf16.mxu0 0
        %481 = vmatpush1.bf16.msra.mxu0 0
        %482 = vmatprep.subr.bf16.mxu0 0
        %483 = vmatpush1.bf16.msra.mxu0 0
        %484 = vmatprep.subr.bf16.mxu0 0
        %485 = vmatpush1.bf16.msra.mxu0 0
        %486 = vmatprep.subr.bf16.mxu0 0
        %487 = vmatpush1.bf16.msra.mxu0 0
        %488 = vmatprep.subr.bf16.mxu0 0
        %489 = vmatpush1.bf16.msra.mxu0 0
        %490 = vmatprep.subr.bf16.mxu0 0
        %491 = vmatpush1.bf16.msra.mxu0 0
        %492 = vmatprep.subr.bf16.mxu0 0
        %493 = vmatpush1.bf16.msra.mxu0 0
        %494 = vmatprep.subr.bf16.mxu0 0
        %495 = vmatpush1.bf16.msra.mxu0 0
        %496 = vmatprep.subr.bf16.mxu0 0
        %497 = vmatpush1.bf16.msra.mxu0 0
        %498 = vmatprep.mubr.bf16.mxu0 0
        %499 = vmatmul.mubr.bf16.gmra.mrb[0].mxu0 %v460
        %v500 = vpop.f32.mrb[0].mxu0
        %v501 = vadd.f32 0.0, %v500
        %v502 = vpop.f32.mrb[0].mxu0
        %v503 = vpop.f32.mrb[0].mxu0
        %v504 = vpop.f32.mrb[0].mxu0
        %505 = vdwg.mxu0
        %v507 = vsel %vm458, %v278, 0
        %v509 = vsel %vm462, %v454, 0
        %511 = vmatprep.subr.bf16.mxu0 0
        %512 = vmatpush1.bf16.msra.mxu0 %v509
        %513 = vmatprep.subr.bf16.mxu0 0
        %514 = vmatpush1.bf16.msra.mxu0 0
        %515 = vmatprep.subr.bf16.mxu0 0
        %516 = vmatpush1.bf16.msra.mxu0 0
        %517 = vmatprep.subr.bf16.mxu0 0
        %518 = vmatpush1.bf16.msra.mxu0 0
        %519 = vmatprep.subr.bf16.mxu0 0
        %520 = vmatpush1.bf16.msra.mxu0 0
        %521 = vmatprep.subr.bf16.mxu0 0
        %522 = vmatpush1.bf16.msra.mxu0 0
        %523 = vmatprep.subr.bf16.mxu0 0
        %524 = vmatpush1.bf16.msra.mxu0 0
        %525 = vmatprep.subr.bf16.mxu0 0
        %526 = vmatpush1.bf16.msra.mxu0 0
        %527 = vmatprep.subr.bf16.mxu0 0
        %528 = vmatpush1.bf16.msra.mxu0 0
        %529 = vmatprep.subr.bf16.mxu0 0
        %530 = vmatpush1.bf16.msra.mxu0 0
        %531 = vmatprep.subr.bf16.mxu0 0
        %532 = vmatpush1.bf16.msra.mxu0 0
        %533 = vmatprep.subr.bf16.mxu0 0
        %534 = vmatpush1.bf16.msra.mxu0 0
        %535 = vmatprep.subr.bf16.mxu0 0
        %536 = vmatpush1.bf16.msra.mxu0 0
        %537 = vmatprep.subr.bf16.mxu0 0
        %538 = vmatpush1.bf16.msra.mxu0 0
        %539 = vmatprep.subr.bf16.mxu0 0
        %540 = vmatpush1.bf16.msra.mxu0 0
        %541 = vmatprep.subr.bf16.mxu0 0
        %542 = vmatpush1.bf16.msra.mxu0 0
        %543 = vmatprep.mubr.bf16.mxu0 0
        %544 = vmatmul.mubr.bf16.gmra.mrb[0].mxu0 %v507
        %v545 = vpop.f32.mrb[0].mxu0
        %v546 = vadd.f32 %v501, %v545
        %v547 = vpop.f32.mrb[0].mxu0
        %v548 = vpop.f32.mrb[0].mxu0
        %v549 = vpop.f32.mrb[0].mxu0
        %550 = vdwg.mxu0
        %551 = vrot.lane.b32.xlu0 %v454, 124
        %v552 = vpop.permute.xlu0 %551
        %v554 = vsel %vm458, %v280, 0
        %v557 = vsel %vm462, %v552, 0
        %559 = vmatprep.subr.bf16.mxu0 0
        %560 = vmatpush1.bf16.msra.mxu0 %v557
        %561 = vmatprep.subr.bf16.mxu0 0
        %562 = vmatpush1.bf16.msra.mxu0 0
        %563 = vmatprep.subr.bf16.mxu0 0
        %564 = vmatpush1.bf16.msra.mxu0 0
        %565 = vmatprep.subr.bf16.mxu0 0
        %566 = vmatpush1.bf16.msra.mxu0 0
        %567 = vmatprep.subr.bf16.mxu0 0
        %568 = vmatpush1.bf16.msra.mxu0 0
        %569 = vmatprep.subr.bf16.mxu0 0
        %570 = vmatpush1.bf16.msra.mxu0 0
        %571 = vmatprep.subr.bf16.mxu0 0
        %572 = vmatpush1.bf16.msra.mxu0 0
        %573 = vmatprep.subr.bf16.mxu0 0
        %574 = vmatpush1.bf16.msra.mxu0 0
        %575 = vmatprep.subr.bf16.mxu0 0
        %576 = vmatpush1.bf16.msra.mxu0 0
        %577 = vmatprep.subr.bf16.mxu0 0
        %578 = vmatpush1.bf16.msra.mxu0 0
        %579 = vmatprep.subr.bf16.mxu0 0
        %580 = vmatpush1.bf16.msra.mxu0 0
        %581 = vmatprep.subr.bf16.mxu0 0
        %582 = vmatpush1.bf16.msra.mxu0 0
        %583 = vmatprep.subr.bf16.mxu0 0
        %584 = vmatpush1.bf16.msra.mxu0 0
        %585 = vmatprep.subr.bf16.mxu0 0
        %586 = vmatpush1.bf16.msra.mxu0 0
        %587 = vmatprep.subr.bf16.mxu0 0
        %588 = vmatpush1.bf16.msra.mxu0 0
        %589 = vmatprep.subr.bf16.mxu0 0
        %590 = vmatpush1.bf16.msra.mxu0 0
        %591 = vmatprep.mubr.bf16.mxu0 0
        %592 = vmatmul.mubr.bf16.gmra.mrb[0].mxu0 %v554
        %v593 = vpop.f32.mrb[0].mxu0
        %v594 = vadd.f32 0.0, %v593
        %v595 = vpop.f32.mrb[0].mxu0
        %v596 = vpop.f32.mrb[0].mxu0
        %v597 = vpop.f32.mrb[0].mxu0
        %598 = vdwg.mxu0
        %v599 = vadd.f32 %v546, %v594
        %601 = vset.pattern.permute.xlu0 0
        %602 = vperm.xlu0 %601, %v282
        %v603 = vpop.permute.xlu0 %602
        %v605 = vadd.f32 %v599, %v603
        %v606 = vmax.f32 %v605, 0.0
        %608 = vset.pattern.permute.xlu0 0
        %609 = vperm.xlu0 %608, %v284
        %v610 = vpop.permute.xlu0 %609
        %v613 = vsel %vm299, %v283, 0
        %v616 = vsel %vm303, %v286, 0
        %618 = vmatprep.subr.bf16.mxu0 0
        %619 = vmatpush1.bf16.msra.mxu0 %v616
        %620 = vmatprep.subr.bf16.mxu0 0
        %621 = vmatpush1.bf16.msra.mxu0 0
        %622 = vmatprep.subr.bf16.mxu0 0
        %623 = vmatpush1.bf16.msra.mxu0 0
        %624 = vmatprep.subr.bf16.mxu0 0
        %625 = vmatpush1.bf16.msra.mxu0 0
        %626 = vmatprep.subr.bf16.mxu0 0
        %627 = vmatpush1.bf16.msra.mxu0 0
        %628 = vmatprep.subr.bf16.mxu0 0
        %629 = vmatpush1.bf16.msra.mxu0 0
        %630 = vmatprep.subr.bf16.mxu0 0
        %631 = vmatpush1.bf16.msra.mxu0 0
        %632 = vmatprep.subr.bf16.mxu0 0
        %633 = vmatpush1.bf16.msra.mxu0 0
        %634 = vmatprep.subr.bf16.mxu0 0
        %635 = vmatpush1.bf16.msra.mxu0 0
        %636 = vmatprep.subr.bf16.mxu0 0
        %637 = vmatpush1.bf16.msra.mxu0 0
        %638 = vmatprep.subr.bf16.mxu0 0
        %639 = vmatpush1.bf16.msra.mxu0 0
        %640 = vmatprep.subr.bf16.mxu0 0
        %641 = vmatpush1.bf16.msra.mxu0 0
        %642 = vmatprep.subr.bf16.mxu0 0
        %643 = vmatpush1.bf16.msra.mxu0 0
        %644 = vmatprep.subr.bf16.mxu0 0
        %645 = vmatpush1.bf16.msra.mxu0 0
        %646 = vmatprep.subr.bf16.mxu0 0
        %647 = vmatpush1.bf16.msra.mxu0 0
        %648 = vmatprep.subr.bf16.mxu0 0
        %649 = vmatpush1.bf16.msra.mxu0 0
        %650 = vmatprep.mubr.bf16.mxu0 0
        %651 = vmatmul.mubr.bf16.gmra.mrb[0].mxu0 %v613
        %v652 = vpop.f32.mrb[0].mxu0
        %v653 = vadd.f32 %v610, %v652
        %v654 = vpop.f32.mrb[0].mxu0
        %v655 = vpop.f32.mrb[0].mxu0
        %v656 = vpop.f32.mrb[0].mxu0
        %657 = vdwg.mxu0
        %v658 = vadd.f32 %v606, %v653
        %v659 = vmax.f32 %v658, 0.0
        %vm660 = vcmask 130048
        %661 = vst.msk [vmem:[%s269] sm:$0xff] %vm660, %v659
        %s662 = sand.u32 %s181, 1
        %s663 = scalar_lea.sflag [#allocation3], %s662
        %s664 = sand.u32 %s181, 1
        %s665 = smul.addr %s664, 8
        %s666 = scalar_lea.vmem [#allocation2], %s665
        // Predicated region
        $region49: #{tpu_custom_call.1} parent=47 // pred_check
          %p667 = pneg %p191
        $region50: #{tpu_custom_call.1} parent=47 // pred_check_branch
          %669 = sbr.rel (%p667) target = $region52
        $region51: #{tpu_custom_call.1} parent=47 // pred_region
          %s671 = ssub.s32 128, 128
          %672 = vsyncadd %s663, %s671
          %s673 = smul.addr %s21, 128
          %s674 = scalar_lea.hbm %s7, %s673
          %s676 = sshll.u32 %s666, 4
          %s677 = int_to_ptr.vmem [resolvable:$true] %s676
          %679 = dma.vmem_to_hbm [thread:$0]  %s677, 128, %s674, %s663
        $region52: #{tpu_custom_call.1} parent=47 // pred_fallthru
          _
      $region48: #{tpu_custom_call.1} parent=5 // pred_fallthru
        _
      %p680 = scmp.le.s32.totalorder 2, %s16
      // Predicated region
      $region53: #{tpu_custom_call.1} parent=5 // pred_check
        %p681 = pneg %p680
      $region54: #{tpu_custom_call.1} parent=5 // pred_check_branch
        %683 = sbr.rel (%p681) target = $region56
      $region55: #{tpu_custom_call.1} parent=5 // pred_region
        %s684 = ssub.s32 %s16, 2
        // Predicated region
        $region57: #{tpu_custom_call.1} parent=55 // pred_check
          %p685 = pneg %p197
        $region58: #{tpu_custom_call.1} parent=55 // pred_check_branch
          %687 = sbr.rel (%p685) target = $region60
        $region59: #{tpu_custom_call.1} parent=55 // pred_region
          %s688 = sand.u32 %s182, 1
          %s689 = scalar_lea.sflag [#allocation3], %s688
          %s690 = sand.u32 %s182, 1
          %s691 = smul.addr %s690, 8
          %s692 = scalar_lea.vmem [#allocation2], %s691
          %693 = dma.done %s689, 128
        $region60: #{tpu_custom_call.1} parent=55 // pred_fallthru
          _
      $region56: #{tpu_custom_call.1} parent=5 // pred_fallthru
        _
    $region6: #{tpu_custom_call.1} parent=1 // loop_footer
      %s20 = sadd.s32 1, %s16
    $region7: #{tpu_custom_call.1} parent=1 // loop_footer_branch
      %15 = sbr.rel target = $region3
    $region8: #{tpu_custom_call.1} parent=1 // loop_exit
      _
    %694 = vsyncpa [#allocation3], 1
    %s695 = scalar_lea.sflag [#allocation3], 1
    %696 = vsyncpa %s695, 1

</llo_original>
